<compile_context>
chip_gen: v7x
topology: tpu7x:2x2x1
jax: 0.10.0
libtpu: 0.0.40
codegen_flags: <defaults>
</compile_context>

<pallas_src>
import jax
import jax.numpy as jnp
from jax.experimental import pallas as pl
from jax.experimental.pallas import tpu as pltpu

HIDDEN1 = 128
HIDDEN2 = 64          # logical fc2 width (padded to 128 lanes in the params)
HIDDEN2_PAD = 128
NPAD = 128            # fc3 output lanes (num_classes padded up)


def _round_up(x, m):
    return ((x + m - 1) // m) * m


def mlp_kernel(x_ref, w1_ref, b1_ref, w2_ref, b2_ref, w3_ref, b3_ref, o_ref):
    # x_ref is a (TB, input_size) bf16 tile; weights bf16, biases f32.
    x = x_ref[...]

    # fc1 + ReLU  (dropout1 == identity at inference)
    h1 = jnp.dot(x, w1_ref[...], preferred_element_type=jnp.float32) + b1_ref[...]
    h1 = jnp.maximum(h1, 0.0)

    # fc2 + ReLU  (dropout2 == identity at inference).  w2/b2 are padded to
    # 128 lanes, so h2 is a full-lane tile (unmasked VPU ops below).
    h2 = jnp.dot(h1.astype(jnp.bfloat16), w2_ref[...],
                 preferred_element_type=jnp.float32) + b2_ref[...]
    h2 = jnp.maximum(h2, 0.0)

    # fc3 (logits, no activation) — K and N both 128-padded; store is
    # lane-dense bf16.
    out = jnp.dot(h2.astype(jnp.bfloat16), w3_ref[...],
                  preferred_element_type=jnp.float32) + b3_ref[...]
    o_ref[...] = out.astype(o_ref.dtype)


def mlp_forward(x, params, num_classes, *, tb=None):
    """x: (batch, input_size) f32/bf16. params: pre-padded (see init_params)."""
    w1, b1, w2, b2, w3, b3 = params
    batch, in_features = x.shape
    n_pad = w3.shape[1]

    # Single cast point for matmul operands; cast BEFORE padding so the pad
    # copy moves half the bytes.
    x = x.astype(jnp.bfloat16)

    # Batch tiling: multiples of 16 (bf16 packs 16 sublanes per vreg).
    batch16 = _round_up(batch, 16)
    if tb is None:
        # ~2 grid steps: one per TensorCore on v7x; negligible extra per-step
        # overhead on single-TC v5e/v6e.  Cap at 512 rows for big batches.
        tb = min(512, _round_up(pl.cdiv(batch16, 2), 16))
    else:
        tb = _round_up(min(tb, batch16), 16)
    padded_batch = _round_up(batch, tb)
    if padded_batch != batch:
        x = jnp.pad(x, ((0, padded_batch - batch), (0, 0)))

    grid = (padded_batch // tb,)

    # Weights/biases: constant index_map -> VMEM-resident, DMA'd once.
    const = lambda shape: pl.BlockSpec(shape, lambda i: (0, 0))

    out = pl.pallas_call(
        mlp_kernel,
        out_shape=jax.ShapeDtypeStruct((padded_batch, n_pad), jnp.bfloat16),
        grid_spec=pl.GridSpec(
            grid=grid,
            in_specs=[
                pl.BlockSpec((tb, in_features), lambda i: (i, 0)),  # x tile
                const(w1.shape), const(b1.shape),
                const(w2.shape), const(b2.shape),
                const(w3.shape), const(b3.shape),
            ],
            out_specs=pl.BlockSpec((tb, n_pad), lambda i: (i, 0)),
        ),
        compiler_params=pltpu.CompilerParams(
            dimension_semantics=("parallel",),       # megacore split on v7x
            vmem_limit_bytes=32 * 1024 * 1024,       # explicit, safe on v5e/v6e/v7x
        ),
    )(x, w1, b1, w2, b2, w3, b3)

    # Slice padded rows/lanes off; cast the small logits slab back to f32.
    return out[:batch, :num_classes].astype(jnp.float32)


def init_params(key, input_size, num_classes):
    """nn.Linear-style init; weights stored (in, out) in bf16, biases f32 rows.

    fc2 output and fc3 input/output are zero-padded to 128 lanes ONCE here so
    the per-call wrapper does no padding of the params.
    """
    dims = [(input_size, HIDDEN1), (HIDDEN1, HIDDEN2), (HIDDEN2, num_classes)]
    raw = []
    for fan_in, fan_out in dims:
        kw, kb, key = jax.random.split(key, 3)
        bound = 1.0 / jnp.sqrt(jnp.float32(fan_in))
        w = jax.random.uniform(kw, (fan_in, fan_out), jnp.float32, -bound, bound)
        b = jax.random.uniform(kb, (1, fan_out), jnp.float32, -bound, bound)
        raw.append((w, b))

    (w1, b1), (w2, b2), (w3, b3) = raw
    # Pad fc2 N: 64 -> 128 (zero cols / zero bias lanes -> zero activations).
    w2 = jnp.pad(w2, ((0, 0), (0, HIDDEN2_PAD - HIDDEN2)))
    b2 = jnp.pad(b2, ((0, 0), (0, HIDDEN2_PAD - HIDDEN2)))
    # Pad fc3 K: 64 -> 128 (zero rows absorb the padded zero activations) and
    # N: num_classes -> 128 (lane-dense output store).
    w3 = jnp.pad(w3, ((0, HIDDEN2_PAD - HIDDEN2), (0, NPAD - num_classes)))
    b3 = jnp.pad(b3, ((0, 0), (0, NPAD - num_classes)))

    return [w1.astype(jnp.bfloat16), b1,
            w2.astype(jnp.bfloat16), b2,
            w3.astype(jnp.bfloat16), b3]


def reference_forward(x, params, num_classes):
    # Same cast pattern as the kernel (bf16 operands, f32 acc, bf16 store).
    w1, b1, w2, b2, w3, b3 = params
    xb = x.astype(jnp.bfloat16)
    h1 = jnp.maximum(jnp.dot(xb, w1, preferred_element_type=jnp.float32) + b1, 0.0)
    h2 = jnp.maximum(
        jnp.dot(h1.astype(jnp.bfloat16), w2, preferred_element_type=jnp.float32) + b2,
        0.0)
    out = jnp.dot(h2.astype(jnp.bfloat16), w3, preferred_element_type=jnp.float32) + b3
    out = out.astype(jnp.bfloat16).astype(jnp.float32)
    return out[:, :num_classes]


if __name__ == "__main__":
    key = jax.random.PRNGKey(0)
    batch, input_size, num_classes = 200, 32, 10  # non-multiple batch exercises padding

    kx, kp = jax.random.split(key)
    x = jax.random.normal(kx, (batch, input_size), jnp.float32)
    params = init_params(kp, input_size, num_classes)

    out = mlp_forward(x, params, num_classes)
    out = jax.block_until_ready(out)

    ref = reference_forward(x, params, num_classes)
    assert out.shape == (batch, num_classes), out.shape
    assert jnp.allclose(out, ref, atol=2e-2, rtol=2e-2), "mismatch vs. JAX reference"

    print("KERNEL_OK")
</pallas_src>

<mosaic_0001>
module attributes {stable_mosaic.version = 11 : i64} {
  func.func @mlp_kernel(%arg0: i32, %arg1: memref<112x32xbf16, #tpu.memory_space<vmem>>, %arg2: memref<32x128xbf16, #tpu.memory_space<vmem>>, %arg3: memref<1x128xf32, #tpu.memory_space<vmem>>, %arg4: memref<128x128xbf16, #tpu.memory_space<vmem>>, %arg5: memref<1x128xf32, #tpu.memory_space<vmem>>, %arg6: memref<128x128xbf16, #tpu.memory_space<vmem>>, %arg7: memref<1x128xf32, #tpu.memory_space<vmem>>, %arg8: memref<112x128xbf16, #tpu.memory_space<vmem>>) attributes {dimension_semantics = [#tpu.dimension_semantics<parallel>], iteration_bounds = array<i64: 2>, scalar_prefetch = 0 : i64, scratch_operands = 0 : i64, tpu.core_type = #tpu.core_type<tc>, window_params = [{transform_indices = @transform_0, window_bounds = array<i64: 112, 32>}, {pipeline_mode = #tpu.pipeline_mode<synchronous>, transform_indices = @transform_1, window_bounds = array<i64: 32, 128>}, {pipeline_mode = #tpu.pipeline_mode<synchronous>, transform_indices = @transform_2, window_bounds = array<i64: 1, 128>}, {pipeline_mode = #tpu.pipeline_mode<synchronous>, transform_indices = @transform_3, window_bounds = array<i64: 128, 128>}, {pipeline_mode = #tpu.pipeline_mode<synchronous>, transform_indices = @transform_4, window_bounds = array<i64: 1, 128>}, {pipeline_mode = #tpu.pipeline_mode<synchronous>, transform_indices = @transform_5, window_bounds = array<i64: 128, 128>}, {pipeline_mode = #tpu.pipeline_mode<synchronous>, transform_indices = @transform_6, window_bounds = array<i64: 1, 128>}, {transform_indices = @transform_7, window_bounds = array<i64: 112, 128>}]} {
    %c0 = arith.constant 0 : index
    %c0_0 = arith.constant 0 : index
    %0 = vector.load %arg1[%c0, %c0_0] : memref<112x32xbf16, #tpu.memory_space<vmem>>, vector<112x32xbf16>
    %c0_1 = arith.constant 0 : index
    %c0_2 = arith.constant 0 : index
    %1 = vector.load %arg2[%c0_1, %c0_2] : memref<32x128xbf16, #tpu.memory_space<vmem>>, vector<32x128xbf16>
    %cst = arith.constant dense<0.000000e+00> : vector<112x128xf32>
    %2 = tpu.matmul %0, %1, %cst {dimension_numbers = #tpu.dot_dimension_numbers<[1], [0], [0], [1], [0, 0, 1, 1], [], []>} : vector<112x32xbf16>, vector<32x128xbf16>, vector<112x128xf32> -> vector<112x128xf32>
    %c0_3 = arith.constant 0 : index
    %c0_4 = arith.constant 0 : index
    %3 = vector.load %arg3[%c0_3, %c0_4] : memref<1x128xf32, #tpu.memory_space<vmem>>, vector<1x128xf32>
    %4 = vector.broadcast %3 : vector<1x128xf32> to vector<112x128xf32>
    %5 = arith.addf %2, %4 : vector<112x128xf32>
    %cst_5 = arith.constant 0.000000e+00 : f32
    %6 = vector.broadcast %cst_5 : f32 to vector<112x128xf32>
    %7 = arith.maximumf %5, %6 : vector<112x128xf32>
    %8 = arith.truncf %7 : vector<112x128xf32> to vector<112x128xbf16>
    %c0_6 = arith.constant 0 : index
    %c0_7 = arith.constant 0 : index
    %9 = vector.load %arg4[%c0_6, %c0_7] : memref<128x128xbf16, #tpu.memory_space<vmem>>, vector<128x128xbf16>
    %cst_8 = arith.constant dense<0.000000e+00> : vector<112x128xf32>
    %10 = tpu.matmul %8, %9, %cst_8 {dimension_numbers = #tpu.dot_dimension_numbers<[1], [0], [0], [1], [0, 0, 1, 1], [], []>} : vector<112x128xbf16>, vector<128x128xbf16>, vector<112x128xf32> -> vector<112x128xf32>
    %c0_9 = arith.constant 0 : index
    %c0_10 = arith.constant 0 : index
    %11 = vector.load %arg5[%c0_9, %c0_10] : memref<1x128xf32, #tpu.memory_space<vmem>>, vector<1x128xf32>
    %12 = vector.broadcast %11 : vector<1x128xf32> to vector<112x128xf32>
    %13 = arith.addf %10, %12 : vector<112x128xf32>
    %cst_11 = arith.constant 0.000000e+00 : f32
    %14 = vector.broadcast %cst_11 : f32 to vector<112x128xf32>
    %15 = arith.maximumf %13, %14 : vector<112x128xf32>
    %16 = arith.truncf %15 : vector<112x128xf32> to vector<112x128xbf16>
    %c0_12 = arith.constant 0 : index
    %c0_13 = arith.constant 0 : index
    %17 = vector.load %arg6[%c0_12, %c0_13] : memref<128x128xbf16, #tpu.memory_space<vmem>>, vector<128x128xbf16>
    %cst_14 = arith.constant dense<0.000000e+00> : vector<112x128xf32>
    %18 = tpu.matmul %16, %17, %cst_14 {dimension_numbers = #tpu.dot_dimension_numbers<[1], [0], [0], [1], [0, 0, 1, 1], [], []>} : vector<112x128xbf16>, vector<128x128xbf16>, vector<112x128xf32> -> vector<112x128xf32>
    %c0_15 = arith.constant 0 : index
    %c0_16 = arith.constant 0 : index
    %19 = vector.load %arg7[%c0_15, %c0_16] : memref<1x128xf32, #tpu.memory_space<vmem>>, vector<1x128xf32>
    %20 = vector.broadcast %19 : vector<1x128xf32> to vector<112x128xf32>
    %21 = arith.addf %18, %20 : vector<112x128xf32>
    %22 = arith.truncf %21 : vector<112x128xf32> to vector<112x128xbf16>
    %c0_17 = arith.constant 0 : index
    %c0_18 = arith.constant 0 : index
    %23 = vector.load %arg8[%c0_17, %c0_18] : memref<112x128xbf16, #tpu.memory_space<vmem>>, vector<112x128xbf16>
    tpu.vector_store %arg8[%c0_17, %c0_18], %22 {strides = array<i32>} : memref<112x128xbf16, #tpu.memory_space<vmem>>, vector<112x128xbf16>,
    return
  }
  func.func @transform_0(%arg0: i32) -> (i32, i32) {
    %c0_i32 = arith.constant 0 : i32
    %c0_i32_0 = arith.constant 0 : i32
    return %arg0, %c0_i32 : i32, i32
  }
  func.func @transform_1(%arg0: i32) -> (i32, i32) {
    %c0_i32 = arith.constant 0 : i32
    %c0_i32_0 = arith.constant 0 : i32
    %c0_i32_1 = arith.constant 0 : i32
    return %c0_i32, %c0_i32_0 : i32, i32
  }
  func.func @transform_2(%arg0: i32) -> (i32, i32) {
    %c0_i32 = arith.constant 0 : i32
    %c0_i32_0 = arith.constant 0 : i32
    %c0_i32_1 = arith.constant 0 : i32
    return %c0_i32, %c0_i32_0 : i32, i32
  }
  func.func @transform_3(%arg0: i32) -> (i32, i32) {
    %c0_i32 = arith.constant 0 : i32
    %c0_i32_0 = arith.constant 0 : i32
    %c0_i32_1 = arith.constant 0 : i32
    return %c0_i32, %c0_i32_0 : i32, i32
  }
  func.func @transform_4(%arg0: i32) -> (i32, i32) {
    %c0_i32 = arith.constant 0 : i32
    %c0_i32_0 = arith.constant 0 : i32
    %c0_i32_1 = arith.constant 0 : i32
    return %c0_i32, %c0_i32_0 : i32, i32
  }
  func.func @transform_5(%arg0: i32) -> (i32, i32) {
    %c0_i32 = arith.constant 0 : i32
    %c0_i32_0 = arith.constant 0 : i32
    %c0_i32_1 = arith.constant 0 : i32
    return %c0_i32, %c0_i32_0 : i32, i32
  }
  func.func @transform_6(%arg0: i32) -> (i32, i32) {
    %c0_i32 = arith.constant 0 : i32
    %c0_i32_0 = arith.constant 0 : i32
    %c0_i32_1 = arith.constant 0 : i32
    return %c0_i32, %c0_i32_0 : i32, i32
  }
  func.func @transform_7(%arg0: i32) -> (i32, i32) {
    %c0_i32 = arith.constant 0 : i32
    %c0_i32_0 = arith.constant 0 : i32
    return %arg0, %c0_i32 : i32, i32
  }
}

</mosaic_0001>

<llo_original>
// kernel: tpu_custom_call.1
$region0: #{tpu_custom_call.1}
  #allocation0 [shape = 'u32[]', space=smem, size = 0x4, offset = 0x4, fixed_abs, tag = 'smem constant byte address 0x4 - core index']
  #allocation1 [shape = 'u32[144,128]{1,0:T(1,128)}', space=vmem, size = 0x12000, scoped, tag = 'internal scratch']
  %s0 = inlined_call_operand.vmem [shape: bf16[224,32], index: 0, kind: input, shape index: {}]
  %s1 = inlined_call_operand.vmem [shape: bf16[32,128], index: 1, kind: input, shape index: {}]
  %s2 = inlined_call_operand.vmem [shape: f32[1,128], index: 2, kind: input, shape index: {}]
  %s3 = inlined_call_operand.vmem [shape: bf16[128,128], index: 3, kind: input, shape index: {}]
  %s4 = inlined_call_operand.vmem [shape: f32[1,128], index: 4, kind: input, shape index: {}]
  %s5 = inlined_call_operand.vmem [shape: bf16[128,128], index: 5, kind: input, shape index: {}]
  %s6 = inlined_call_operand.vmem [shape: f32[1,128], index: 6, kind: input, shape index: {}]
  %s7 = inlined_call_operand.hbm [shape: bf16[224,128], index: 7, kind: output, shape index: {}]
  %s8 = sld [smem:[#allocation0]]
  $region61: #{tpu_custom_call.1} parent=0
    _
  %s10 = ssub.s32 1, %s8
  %s11 = scalar_select 0, %s10, %s8
  $region1: #{tpu_custom_call.1} parent=0
    #allocation2 [shape = 'u8[57344]{0}', space=vmem, size = 0xe000, scoped, tag = 'output window, operand 0']
    #allocation3 [shape = 's32[2]{0}', space=sflag, size = 0x8, scoped, tag = 'scoped memory for tpu_custom_call.1']
    %12 = vsyncpa [#allocation3], 0
    %s13 = scalar_lea.sflag [#allocation3], 1
    %14 = vsyncpa %s13, 0
    loop: start=0, step=1, limit=4
    $region2: #{tpu_custom_call.1} parent=1 // loop_pre_header
      _
    $region3: #{tpu_custom_call.1} parent=1 // loop_header
      %s16 = sphi 0, %s20
      %p17 = scmp.ge.s32.totalorder %s16, 4
      %s26 = sphi 0, %s28
      %s29 = sphi 0, %s26
      %s30 = sphi 0, %s29
      %s46 = sphi 0, %s30
      %s50 = sphi 0, %s50
      %s52 = sphi 0, %s50
      %s53 = sphi 0, %s52
      %s67 = sphi 0, %s53
      %s71 = sphi 0, %s71
      %s73 = sphi 0, %s71
      %s74 = sphi 0, %s73
      %s88 = sphi 0, %s74
      %s92 = sphi 0, %s92
      %s94 = sphi 0, %s92
      %s95 = sphi 0, %s94
      %s109 = sphi 0, %s95
      %s113 = sphi 0, %s113
      %s115 = sphi 0, %s113
      %s116 = sphi 0, %s115
      %s130 = sphi 0, %s116
      %s134 = sphi 0, %s134
      %s136 = sphi 0, %s134
      %s137 = sphi 0, %s136
      %s151 = sphi 0, %s137
      %s155 = sphi 0, %s155
      %s157 = sphi 0, %s155
      %s158 = sphi 0, %s157
      %s172 = sphi 0, %s158
      %s178 = sphi 0, %s180
      %s181 = sphi 0, %s178
      %s182 = sphi 0, %s181
      %s198 = sphi 0, %s182
    $region4: #{tpu_custom_call.1} parent=1 // loop_header_branch
      %19 = sbr.rel (%p17) target = $region8
    $region5: #{tpu_custom_call.1} parent=1 // loop_body
      %s21 = ssub.s32 %s16, 1
      %s22 = ssub.s32 %s16, 2
      %s23 = sadd.s32 %s16, 1
      %s24 = ssub.s32 %s16, %s23
      %p25 = scmp.eq.s32.totalorder %s24, 0
      %s27 = sadd.s32 %s26, 1
      %s28 = scalar_select %p25, %s26, %s27
      %p31 = pneg %p25
      %p32 = scmp.eq.s32.totalorder %s16, 1
      %p33 = por %p31, %p32
      %p34 = scmp.ne.s32.totalorder %s26, %s29
      %p35 = scmp.eq.s32.totalorder %s16, 0
      %p36 = por %p34, %p35
      %p37 = scmp.ne.s32.totalorder %s26, %s29
      %p38 = scmp.eq.s32.totalorder %s21, 1
      %p39 = por %p37, %p38
      %p40 = scmp.ne.s32.totalorder %s29, %s30
      %p41 = scmp.eq.s32.totalorder %s21, 0
      %p42 = por %p40, %p41
      %p43 = scmp.ne.s32.totalorder %s29, %s30
      %p44 = scmp.eq.s32.totalorder %s22, 1
      %p45 = por %p43, %p44
      %p47 = scmp.ne.s32.totalorder %s30, %s46
      %p48 = scmp.eq.s32.totalorder %s22, 0
      %p49 = por %p47, %p48
      %s51 = sadd.s32 %s50, 1
      %p54 = scmp.eq.s32.totalorder %s16, 1
      %p55 = scmp.ne.s32.totalorder %s50, %s52
      %p56 = scmp.eq.s32.totalorder %s16, 0
      %p57 = por %p55, %p56
      %p58 = scmp.ne.s32.totalorder %s50, %s52
      %p59 = scmp.eq.s32.totalorder %s21, 1
      %p60 = por %p58, %p59
      %p61 = scmp.ne.s32.totalorder %s52, %s53
      %p62 = scmp.eq.s32.totalorder %s21, 0
      %p63 = por %p61, %p62
      %p64 = scmp.ne.s32.totalorder %s52, %s53
      %p65 = scmp.eq.s32.totalorder %s22, 1
      %p66 = por %p64, %p65
      %p68 = scmp.ne.s32.totalorder %s53, %s67
      %p69 = scmp.eq.s32.totalorder %s22, 0
      %p70 = por %p68, %p69
      %s72 = sadd.s32 %s71, 1
      %p75 = scmp.eq.s32.totalorder %s16, 1
      %p76 = scmp.ne.s32.totalorder %s71, %s73
      %p77 = scmp.eq.s32.totalorder %s16, 0
      %p78 = por %p76, %p77
      %p79 = scmp.ne.s32.totalorder %s71, %s73
      %p80 = scmp.eq.s32.totalorder %s21, 1
      %p81 = por %p79, %p80
      %p82 = scmp.ne.s32.totalorder %s73, %s74
      %p83 = scmp.eq.s32.totalorder %s21, 0
      %p84 = por %p82, %p83
      %p85 = scmp.ne.s32.totalorder %s73, %s74
      %p86 = scmp.eq.s32.totalorder %s22, 1
      %p87 = por %p85, %p86
      %p89 = scmp.ne.s32.totalorder %s74, %s88
      %p90 = scmp.eq.s32.totalorder %s22, 0
      %p91 = por %p89, %p90
      %s93 = sadd.s32 %s92, 1
      %p96 = scmp.eq.s32.totalorder %s16, 1
      %p97 = scmp.ne.s32.totalorder %s92, %s94
      %p98 = scmp.eq.s32.totalorder %s16, 0
      %p99 = por %p97, %p98
      %p100 = scmp.ne.s32.totalorder %s92, %s94
      %p101 = scmp.eq.s32.totalorder %s21, 1
      %p102 = por %p100, %p101
      %p103 = scmp.ne.s32.totalorder %s94, %s95
      %p104 = scmp.eq.s32.totalorder %s21, 0
      %p105 = por %p103, %p104
      %p106 = scmp.ne.s32.totalorder %s94, %s95
      %p107 = scmp.eq.s32.totalorder %s22, 1
      %p108 = por %p106, %p107
      %p110 = scmp.ne.s32.totalorder %s95, %s109
      %p111 = scmp.eq.s32.totalorder %s22, 0
      %p112 = por %p110, %p111
      %s114 = sadd.s32 %s113, 1
      %p117 = scmp.eq.s32.totalorder %s16, 1
      %p118 = scmp.ne.s32.totalorder %s113, %s115
      %p119 = scmp.eq.s32.totalorder %s16, 0
      %p120 = por %p118, %p119
      %p121 = scmp.ne.s32.totalorder %s113, %s115
      %p122 = scmp.eq.s32.totalorder %s21, 1
      %p123 = por %p121, %p122
      %p124 = scmp.ne.s32.totalorder %s115, %s116
      %p125 = scmp.eq.s32.totalorder %s21, 0
      %p126 = por %p124, %p125
      %p127 = scmp.ne.s32.totalorder %s115, %s116
      %p128 = scmp.eq.s32.totalorder %s22, 1
      %p129 = por %p127, %p128
      %p131 = scmp.ne.s32.totalorder %s116, %s130
      %p132 = scmp.eq.s32.totalorder %s22, 0
      %p133 = por %p131, %p132
      %s135 = sadd.s32 %s134, 1
      %p138 = scmp.eq.s32.totalorder %s16, 1
      %p139 = scmp.ne.s32.totalorder %s134, %s136
      %p140 = scmp.eq.s32.totalorder %s16, 0
      %p141 = por %p139, %p140
      %p142 = scmp.ne.s32.totalorder %s134, %s136
      %p143 = scmp.eq.s32.totalorder %s21, 1
      %p144 = por %p142, %p143
      %p145 = scmp.ne.s32.totalorder %s136, %s137
      %p146 = scmp.eq.s32.totalorder %s21, 0
      %p147 = por %p145, %p146
      %p148 = scmp.ne.s32.totalorder %s136, %s137
      %p149 = scmp.eq.s32.totalorder %s22, 1
      %p150 = por %p148, %p149
      %p152 = scmp.ne.s32.totalorder %s137, %s151
      %p153 = scmp.eq.s32.totalorder %s22, 0
      %p154 = por %p152, %p153
      %s156 = sadd.s32 %s155, 1
      %p159 = scmp.eq.s32.totalorder %s16, 1
      %p160 = scmp.ne.s32.totalorder %s155, %s157
      %p161 = scmp.eq.s32.totalorder %s16, 0
      %p162 = por %p160, %p161
      %p163 = scmp.ne.s32.totalorder %s155, %s157
      %p164 = scmp.eq.s32.totalorder %s21, 1
      %p165 = por %p163, %p164
      %p166 = scmp.ne.s32.totalorder %s157, %s158
      %p167 = scmp.eq.s32.totalorder %s21, 0
      %p168 = por %p166, %p167
      %p169 = scmp.ne.s32.totalorder %s157, %s158
      %p170 = scmp.eq.s32.totalorder %s22, 1
      %p171 = por %p169, %p170
      %p173 = scmp.ne.s32.totalorder %s158, %s172
      %p174 = scmp.eq.s32.totalorder %s22, 0
      %p175 = por %p173, %p174
      %s176 = ssub.s32 %s16, %s23
      %p177 = scmp.eq.s32.totalorder %s176, 0
      %s179 = sadd.s32 %s178, 1
      %s180 = scalar_select %p177, %s178, %s179
      %p183 = pneg %p177
      %p184 = scmp.eq.s32.totalorder %s16, 1
      %p185 = por %p183, %p184
      %p186 = scmp.ne.s32.totalorder %s178, %s181
      %p187 = scmp.eq.s32.totalorder %s16, 0
      %p188 = por %p186, %p187
      %p189 = scmp.ne.s32.totalorder %s178, %s181
      %p190 = scmp.eq.s32.totalorder %s21, 1
      %p191 = por %p189, %p190
      %p192 = scmp.ne.s32.totalorder %s181, %s182
      %p193 = scmp.eq.s32.totalorder %s21, 0
      %p194 = por %p192, %p193
      %p195 = scmp.ne.s32.totalorder %s181, %s182
      %p196 = scmp.eq.s32.totalorder %s22, 1
      %p197 = por %p195, %p196
      %p199 = scmp.ne.s32.totalorder %s182, %s198
      %p200 = scmp.eq.s32.totalorder %s22, 0
      %p201 = por %p199, %p200
      %p202 = scmp.le.s32.totalorder 1, %s16
      %p203 = scmp.lt.s32.totalorder %s16, 3
      %p204 = pnand %p202, %p203
      %p205 = pneg %p204
      // Predicated region
      $region9: #{tpu_custom_call.1} parent=5 // pred_check
        _
      $region10: #{tpu_custom_call.1} parent=5 // pred_check_branch
        %207 = sbr.rel (%p204) target = $region12
      $region11: #{tpu_custom_call.1} parent=5 // pred_region
        %s208 = ssub.s32 %s16, 1
        // Predicated region
        $region13: #{tpu_custom_call.1} parent=11 // pred_check
          %p209 = pneg %p63
        $region14: #{tpu_custom_call.1} parent=11 // pred_check_branch
          %211 = sbr.rel (%p209) target = $region16
        $region15: #{tpu_custom_call.1} parent=11 // pred_region
          _
        $region16: #{tpu_custom_call.1} parent=11 // pred_fallthru
          _
        // Predicated region
        $region17: #{tpu_custom_call.1} parent=11 // pred_check
          %p212 = pneg %p84
        $region18: #{tpu_custom_call.1} parent=11 // pred_check_branch
          %214 = sbr.rel (%p212) target = $region20
        $region19: #{tpu_custom_call.1} parent=11 // pred_region
          _
        $region20: #{tpu_custom_call.1} parent=11 // pred_fallthru
          _
        // Predicated region
        $region21: #{tpu_custom_call.1} parent=11 // pred_check
          %p215 = pneg %p105
        $region22: #{tpu_custom_call.1} parent=11 // pred_check_branch
          %217 = sbr.rel (%p215) target = $region24
        $region23: #{tpu_custom_call.1} parent=11 // pred_region
          _
        $region24: #{tpu_custom_call.1} parent=11 // pred_fallthru
          _
        // Predicated region
        $region25: #{tpu_custom_call.1} parent=11 // pred_check
          %p218 = pneg %p126
        $region26: #{tpu_custom_call.1} parent=11 // pred_check_branch
          %220 = sbr.rel (%p218) target = $region28
        $region27: #{tpu_custom_call.1} parent=11 // pred_region
          _
        $region28: #{tpu_custom_call.1} parent=11 // pred_fallthru
          _
        // Predicated region
        $region29: #{tpu_custom_call.1} parent=11 // pred_check
          %p221 = pneg %p147
        $region30: #{tpu_custom_call.1} parent=11 // pred_check_branch
          %223 = sbr.rel (%p221) target = $region32
        $region31: #{tpu_custom_call.1} parent=11 // pred_region
          _
        $region32: #{tpu_custom_call.1} parent=11 // pred_fallthru
          _
        // Predicated region
        $region33: #{tpu_custom_call.1} parent=11 // pred_check
          %p224 = pneg %p168
        $region34: #{tpu_custom_call.1} parent=11 // pred_check_branch
          %226 = sbr.rel (%p224) target = $region36
        $region35: #{tpu_custom_call.1} parent=11 // pred_region
          _
        $region36: #{tpu_custom_call.1} parent=11 // pred_fallthru
          _
      $region12: #{tpu_custom_call.1} parent=5 // pred_fallthru
        _
      %p227 = scmp.lt.s32.totalorder %s16, 2
      // Predicated region
      $region37: #{tpu_custom_call.1} parent=5 // pred_check
        %p228 = pneg %p227
      $region38: #{tpu_custom_call.1} parent=5 // pred_check_branch
        %230 = sbr.rel (%p228) target = $region40
      $region39: #{tpu_custom_call.1} parent=5 // pred_region
        // Predicated region
        $region41: #{tpu_custom_call.1} parent=39 // pred_check
          %p231 = pneg %p36
        $region42: #{tpu_custom_call.1} parent=39 // pred_check_branch
          %233 = sbr.rel (%p231) target = $region44
        $region43: #{tpu_custom_call.1} parent=39 // pred_region
          %s234 = smul.u32 14, %s16
          %p235 = scmp.lt.s32.totalorder %s234, 27
          %s236 = scalar_select %p235, %s234, 27
          %s237 = smul.addr %s236, 4
          %s238 = scalar_lea.vmem %s0, %s237
          %s239 = smul.u32 14, %s16
        $region44: #{tpu_custom_call.1} parent=39 // pred_fallthru
          _
      $region40: #{tpu_custom_call.1} parent=5 // pred_fallthru
        _
      %p240 = scmp.le.s32.totalorder 1, %s16
      %p241 = scmp.lt.s32.totalorder %s16, 3
      %p242 = pnand %p240, %p241
      %p243 = pneg %p242
      // Predicated region
      $region45: #{tpu_custom_call.1} parent=5 // pred_check
        _
      $region46: #{tpu_custom_call.1} parent=5 // pred_check_branch
        %245 = sbr.rel (%p242) target = $region48
      $region47: #{tpu_custom_call.1} parent=5 // pred_region
        %s246 = ssub.s32 %s16, 1
        %s247 = smul.u32 14, %s21
        %p248 = scmp.lt.s32.totalorder %s247, 27
        %s249 = scalar_select %p248, %s247, 27
        %s250 = smul.addr %s249, 4
        %s251 = scalar_lea.vmem %s0, %s250
        %p252 = pneg %p42
        %p253 = pneg %p39
        %p254 = pneg %p63
        %p255 = pneg %p60
        %p256 = pneg %p84
        %p257 = pneg %p81
        %p258 = pneg %p105
        %p259 = pneg %p102
        %p260 = pneg %p126
        %p261 = pneg %p123
        %p262 = pneg %p147
        %p263 = pneg %p144
        %p264 = pneg %p168
        %p265 = pneg %p165
        %p266 = pneg %p194
        %p267 = pneg %p191
        %s268 = sand.u32 %s181, 1
        %s269 = scalar_lea.sflag [#allocation3], %s268
        %s270 = sand.u32 %s181, 1
        %s271 = smul.addr %s270, 56
        %s272 = scalar_lea.vmem [#allocation2], %s271
        %s273 = smul.u32 14, %s21
        %p274 = scmp.lt.s32.totalorder %s273, 27
        %s275 = scalar_select %p274, %s273, 27
        %s276 = smul.addr %s275, 4
        %s277 = scalar_lea.vmem %s0, %s276
        %s278 = smul.u32 14, %s21
        %s279 = smul.u32 14, %s21
        %v281 = vld [vmem:[%s277] sm:$0xf]
        %v282 = vld [vmem:[%s277 + $0x4] sm:$0xf]
        %v283 = vld [vmem:[%s277 + $0x8] sm:$0xf]
        %v284 = vld [vmem:[%s277 + $0xc] sm:$0xf]
        %v285 = vld [vmem:[%s277 + $0x10] sm:$0xf]
        %v286 = vld [vmem:[%s277 + $0x14] sm:$0xf]
        %v287 = vld [vmem:[%s277 + $0x18] sm:$0xf]
        %v288 = vld [vmem:[%s277 + $0x1c] sm:$0xf]
        %v289 = vld [vmem:[%s277 + $0x20] sm:$0xf]
        %v290 = vld [vmem:[%s277 + $0x24] sm:$0xf]
        %v291 = vld [vmem:[%s277 + $0x28] sm:$0xf]
        %v292 = vld [vmem:[%s277 + $0x2c] sm:$0xf]
        %v293 = vld [vmem:[%s277 + $0x30] sm:$0xf]
        %v294 = vld [vmem:[%s277 + $0x34] sm:$0xf]
        %v295 = vld [vmem:[%s1] sm:$0xf]
        %v296 = vld [vmem:[%s1 + $0x4] sm:$0xf]
        %v297 = vld [vmem:[%s1 + $0x8] sm:$0xf]
        %v298 = vld [vmem:[%s1 + $0xc] sm:$0xf]
        %v299 = vld [vmem:[%s2] sm:$0x1]
        %v301 = vlaneseq
        %v302 = vshrl.u32 %v301, 7
        %v303 = vsub.s32 0, %v302
        %v304 = vrot.slane %v299, %v303
        %v320 = vunpack.c.l.b16 %v281
        %v321 = vunpack.c.l.b16 %v282
        %v322 = vunpack.c.l.b16 %v283
        %v323 = vunpack.c.l.b16 %v284
        %v324 = vunpack.c.l.b16 %v285
        %v325 = vunpack.c.l.b16 %v286
        %v326 = vunpack.c.l.b16 %v287
        %v327 = vunpack.c.l.b16 %v288
        %v328 = vunpack.c.l.b16 %v289
        %v329 = vunpack.c.l.b16 %v290
        %v330 = vunpack.c.l.b16 %v291
        %v331 = vunpack.c.l.b16 %v292
        %v332 = vunpack.c.l.b16 %v293
        %v333 = vunpack.c.l.b16 %v294
        %v334 = vpack.c.b16 %v321, %v320
        %v335 = vpack.c.b16 %v323, %v322
        %v336 = vpack.c.b16 %v325, %v324
        %v337 = vpack.c.b16 %v327, %v326
        %v338 = vpack.c.b16 %v329, %v328
        %v339 = vpack.c.b16 %v331, %v330
        %v340 = vpack.c.b16 %v333, %v332
        %v345 = vunpack.c.l.b16 %v295
        %v346 = vunpack.c.l.b16 %v296
        %v347 = vunpack.c.l.b16 %v297
        %v348 = vunpack.c.l.b16 %v298
        %v349 = vpack.c.b16 %v346, %v345
        %v350 = vpack.c.b16 %v348, %v347
        %vm353 = vcmask 261120
        %v355 = vsel %vm353, %v334, 0
        %v358 = vsel %vm353, %v335, 0
        %v361 = vsel %vm353, %v336, 0
        %v364 = vsel %vm353, %v337, 0
        %v367 = vsel %vm353, %v338, 0
        %v370 = vsel %vm353, %v339, 0
        %v373 = vsel %vm353, %v340, 0
        %375 = vmatprep.subr.bf16.mxu0 0
        %376 = vmatpush1.bf16.msra.mxu0 %v349
        %377 = vmatprep.subr.bf16.mxu0 0
        %378 = vmatpush1.bf16.msra.mxu0 %v350
        %379 = vmatprep.subr.bf16.mxu0 0
        %380 = vmatpush1.bf16.msra.mxu0 0
        %381 = vmatprep.subr.bf16.mxu0 0
        %382 = vmatpush1.bf16.msra.mxu0 0
        %383 = vmatprep.subr.bf16.mxu0 0
        %384 = vmatpush1.bf16.msra.mxu0 0
        %385 = vmatprep.subr.bf16.mxu0 0
        %386 = vmatpush1.bf16.msra.mxu0 0
        %387 = vmatprep.subr.bf16.mxu0 0
        %388 = vmatpush1.bf16.msra.mxu0 0
        %389 = vmatprep.subr.bf16.mxu0 0
        %390 = vmatpush1.bf16.msra.mxu0 0
        %391 = vmatprep.subr.bf16.mxu0 0
        %392 = vmatpush1.bf16.msra.mxu0 0
        %393 = vmatprep.subr.bf16.mxu0 0
        %394 = vmatpush1.bf16.msra.mxu0 0
        %395 = vmatprep.subr.bf16.mxu0 0
        %396 = vmatpush1.bf16.msra.mxu0 0
        %397 = vmatprep.subr.bf16.mxu0 0
        %398 = vmatpush1.bf16.msra.mxu0 0
        %399 = vmatprep.subr.bf16.mxu0 0
        %400 = vmatpush1.bf16.msra.mxu0 0
        %401 = vmatprep.subr.bf16.mxu0 0
        %402 = vmatpush1.bf16.msra.mxu0 0
        %403 = vmatprep.subr.bf16.mxu0 0
        %404 = vmatpush1.bf16.msra.mxu0 0
        %405 = vmatprep.subr.bf16.mxu0 0
        %406 = vmatpush1.bf16.msra.mxu0 0
        %407 = vmatprep.mubr.bf16.mxu0 0
        %408 = vmatmul.mubr.bf16.gmra.mrb[0].mxu0 %v355
        %v409 = vpop.f32.mrb[0].mxu0
        %v410 = vadd.f32 %v304, %v409
        %v411 = vpop.f32.mrb[0].mxu0
        %v412 = vpop.f32.mrb[0].mxu0
        %v413 = vadd.f32 %v304, %v412
        %v414 = vpop.f32.mrb[0].mxu0
        %415 = vmatprep.mubr.bf16.mxu0 0
        %416 = vmatmul.mubr.bf16.gmra.mrb[0].mxu0 %v358
        %v417 = vpop.f32.mrb[0].mxu0
        %v418 = vadd.f32 %v304, %v417
        %v419 = vpop.f32.mrb[0].mxu0
        %v420 = vpop.f32.mrb[0].mxu0
        %v421 = vadd.f32 %v304, %v420
        %v422 = vpop.f32.mrb[0].mxu0
        %423 = vmatprep.mubr.bf16.mxu0 0
        %424 = vmatmul.mubr.bf16.gmra.mrb[0].mxu0 %v361
        %v425 = vpop.f32.mrb[0].mxu0
        %v426 = vadd.f32 %v304, %v425
        %v427 = vpop.f32.mrb[0].mxu0
        %v428 = vpop.f32.mrb[0].mxu0
        %v429 = vadd.f32 %v304, %v428
        %v430 = vpop.f32.mrb[0].mxu0
        %431 = vmatprep.mubr.bf16.mxu0 0
        %432 = vmatmul.mubr.bf16.gmra.mrb[0].mxu0 %v364
        %v433 = vpop.f32.mrb[0].mxu0
        %v434 = vadd.f32 %v304, %v433
        %v435 = vpop.f32.mrb[0].mxu0
        %v436 = vpop.f32.mrb[0].mxu0
        %v437 = vadd.f32 %v304, %v436
        %v438 = vpop.f32.mrb[0].mxu0
        %439 = vmatprep.mubr.bf16.mxu0 0
        %440 = vmatmul.mubr.bf16.gmra.mrb[0].mxu0 %v367
        %v441 = vpop.f32.mrb[0].mxu0
        %v442 = vadd.f32 %v304, %v441
        %v443 = vpop.f32.mrb[0].mxu0
        %v444 = vpop.f32.mrb[0].mxu0
        %v445 = vadd.f32 %v304, %v444
        %v446 = vpop.f32.mrb[0].mxu0
        %447 = vmatprep.mubr.bf16.mxu0 0
        %448 = vmatmul.mubr.bf16.gmra.mrb[0].mxu0 %v370
        %v449 = vpop.f32.mrb[0].mxu0
        %v450 = vadd.f32 %v304, %v449
        %v451 = vpop.f32.mrb[0].mxu0
        %v452 = vpop.f32.mrb[0].mxu0
        %v453 = vadd.f32 %v304, %v452
        %v454 = vpop.f32.mrb[0].mxu0
        %455 = vmatprep.mubr.bf16.mxu0 0
        %456 = vmatmul.mubr.bf16.gmra.mrb[0].mxu0 %v373
        %v457 = vpop.f32.mrb[0].mxu0
        %v458 = vadd.f32 %v304, %v457
        %v459 = vpop.f32.mrb[0].mxu0
        %v460 = vpop.f32.mrb[0].mxu0
        %v461 = vadd.f32 %v304, %v460
        %v462 = vpop.f32.mrb[0].mxu0
        %463 = vdwg.mxu0
        %v464 = vmax.f32 %v410, 0.0
        %v465 = vmax.f32 %v413, 0.0
        %v466 = vmax.f32 %v418, 0.0
        %v467 = vmax.f32 %v421, 0.0
        %v468 = vmax.f32 %v426, 0.0
        %v469 = vmax.f32 %v429, 0.0
        %v470 = vmax.f32 %v434, 0.0
        %v471 = vmax.f32 %v437, 0.0
        %v472 = vmax.f32 %v442, 0.0
        %v473 = vmax.f32 %v445, 0.0
        %v474 = vmax.f32 %v450, 0.0
        %v475 = vmax.f32 %v453, 0.0
        %v476 = vmax.f32 %v458, 0.0
        %v477 = vmax.f32 %v461, 0.0
        %v478 = vpack.c.bf16 %v465, %v464
        %v479 = vpack.c.bf16 %v467, %v466
        %v480 = vpack.c.bf16 %v469, %v468
        %v481 = vpack.c.bf16 %v471, %v470
        %v482 = vpack.c.bf16 %v473, %v472
        %v483 = vpack.c.bf16 %v475, %v474
        %v484 = vpack.c.bf16 %v477, %v476
        %v485 = vld [vmem:[%s3] sm:$0xf]
        %v486 = vld [vmem:[%s3 + $0x4] sm:$0xf]
        %v487 = vld [vmem:[%s3 + $0x8] sm:$0xf]
        %v488 = vld [vmem:[%s3 + $0xc] sm:$0xf]
        %v489 = vld [vmem:[%s3 + $0x10] sm:$0xf]
        %v490 = vld [vmem:[%s3 + $0x14] sm:$0xf]
        %v491 = vld [vmem:[%s3 + $0x18] sm:$0xf]
        %v492 = vld [vmem:[%s3 + $0x1c] sm:$0xf]
        %v493 = vld [vmem:[%s3 + $0x20] sm:$0xf]
        %v494 = vld [vmem:[%s3 + $0x24] sm:$0xf]
        %v495 = vld [vmem:[%s3 + $0x28] sm:$0xf]
        %v496 = vld [vmem:[%s3 + $0x2c] sm:$0xf]
        %v497 = vld [vmem:[%s3 + $0x30] sm:$0xf]
        %v498 = vld [vmem:[%s3 + $0x34] sm:$0xf]
        %v499 = vld [vmem:[%s3 + $0x38] sm:$0xf]
        %v500 = vld [vmem:[%s3 + $0x3c] sm:$0xf]
        %v501 = vld [vmem:[%s4] sm:$0x1]
        %v503 = vlaneseq
        %v504 = vshrl.u32 %v503, 7
        %v505 = vsub.s32 0, %v504
        %v506 = vrot.slane %v501, %v505
        %v524 = vunpack.c.l.b16 %v485
        %v525 = vunpack.c.l.b16 %v486
        %v526 = vunpack.c.l.b16 %v487
        %v527 = vunpack.c.l.b16 %v488
        %v528 = vunpack.c.l.b16 %v489
        %v529 = vunpack.c.l.b16 %v490
        %v530 = vunpack.c.l.b16 %v491
        %v531 = vunpack.c.l.b16 %v492
        %v532 = vunpack.c.l.b16 %v493
        %v533 = vunpack.c.l.b16 %v494
        %v534 = vunpack.c.l.b16 %v495
        %v535 = vunpack.c.l.b16 %v496
        %v536 = vunpack.c.l.b16 %v497
        %v537 = vunpack.c.l.b16 %v498
        %v538 = vunpack.c.l.b16 %v499
        %v539 = vunpack.c.l.b16 %v500
        %v540 = vpack.c.b16 %v525, %v524
        %v541 = vpack.c.b16 %v527, %v526
        %v542 = vpack.c.b16 %v529, %v528
        %v543 = vpack.c.b16 %v531, %v530
        %v544 = vpack.c.b16 %v533, %v532
        %v545 = vpack.c.b16 %v535, %v534
        %v546 = vpack.c.b16 %v537, %v536
        %v547 = vpack.c.b16 %v539, %v538
        %556 = vmatprep.subr.bf16.mxu0 0
        %557 = vmatpush1.bf16.msra.mxu0 %v540
        %558 = vmatprep.subr.bf16.mxu0 0
        %559 = vmatpush1.bf16.msra.mxu0 %v541
        %560 = vmatprep.subr.bf16.mxu0 0
        %561 = vmatpush1.bf16.msra.mxu0 %v542
        %562 = vmatprep.subr.bf16.mxu0 0
        %563 = vmatpush1.bf16.msra.mxu0 %v543
        %564 = vmatprep.subr.bf16.mxu0 0
        %565 = vmatpush1.bf16.msra.mxu0 %v544
        %566 = vmatprep.subr.bf16.mxu0 0
        %567 = vmatpush1.bf16.msra.mxu0 %v545
        %568 = vmatprep.subr.bf16.mxu0 0
        %569 = vmatpush1.bf16.msra.mxu0 %v546
        %570 = vmatprep.subr.bf16.mxu0 0
        %571 = vmatpush1.bf16.msra.mxu0 %v547
        %572 = vmatprep.subr.bf16.mxu0 0
        %573 = vmatpush1.bf16.msra.mxu0 0
        %574 = vmatprep.subr.bf16.mxu0 0
        %575 = vmatpush1.bf16.msra.mxu0 0
        %576 = vmatprep.subr.bf16.mxu0 0
        %577 = vmatpush1.bf16.msra.mxu0 0
        %578 = vmatprep.subr.bf16.mxu0 0
        %579 = vmatpush1.bf16.msra.mxu0 0
        %580 = vmatprep.subr.bf16.mxu0 0
        %581 = vmatpush1.bf16.msra.mxu0 0
        %582 = vmatprep.subr.bf16.mxu0 0
        %583 = vmatpush1.bf16.msra.mxu0 0
        %584 = vmatprep.subr.bf16.mxu0 0
        %585 = vmatpush1.bf16.msra.mxu0 0
        %586 = vmatprep.subr.bf16.mxu0 0
        %587 = vmatpush1.bf16.msra.mxu0 0
        %588 = vmatprep.mubr.bf16.mxu0 0
        %589 = vmatmul.mubr.bf16.gmra.mrb[0].mxu0 %v478
        %v590 = vpop.f32.mrb[0].mxu0
        %v591 = vadd.f32 %v506, %v590
        %v592 = vpop.f32.mrb[0].mxu0
        %v593 = vpop.f32.mrb[0].mxu0
        %v594 = vadd.f32 %v506, %v593
        %v595 = vpop.f32.mrb[0].mxu0
        %596 = vmatprep.mubr.bf16.mxu0 0
        %597 = vmatmul.mubr.bf16.gmra.mrb[0].mxu0 %v479
        %v598 = vpop.f32.mrb[0].mxu0
        %v599 = vadd.f32 %v506, %v598
        %v600 = vpop.f32.mrb[0].mxu0
        %v601 = vpop.f32.mrb[0].mxu0
        %v602 = vadd.f32 %v506, %v601
        %v603 = vpop.f32.mrb[0].mxu0
        %604 = vmatprep.mubr.bf16.mxu0 0
        %605 = vmatmul.mubr.bf16.gmra.mrb[0].mxu0 %v480
        %v606 = vpop.f32.mrb[0].mxu0
        %v607 = vadd.f32 %v506, %v606
        %v608 = vpop.f32.mrb[0].mxu0
        %v609 = vpop.f32.mrb[0].mxu0
        %v610 = vadd.f32 %v506, %v609
        %v611 = vpop.f32.mrb[0].mxu0
        %612 = vmatprep.mubr.bf16.mxu0 0
        %613 = vmatmul.mubr.bf16.gmra.mrb[0].mxu0 %v481
        %v614 = vpop.f32.mrb[0].mxu0
        %v615 = vadd.f32 %v506, %v614
        %v616 = vpop.f32.mrb[0].mxu0
        %v617 = vpop.f32.mrb[0].mxu0
        %v618 = vadd.f32 %v506, %v617
        %v619 = vpop.f32.mrb[0].mxu0
        %620 = vmatprep.mubr.bf16.mxu0 0
        %621 = vmatmul.mubr.bf16.gmra.mrb[0].mxu0 %v482
        %v622 = vpop.f32.mrb[0].mxu0
        %v623 = vadd.f32 %v506, %v622
        %v624 = vpop.f32.mrb[0].mxu0
        %v625 = vpop.f32.mrb[0].mxu0
        %v626 = vadd.f32 %v506, %v625
        %v627 = vpop.f32.mrb[0].mxu0
        %628 = vmatprep.mubr.bf16.mxu0 0
        %629 = vmatmul.mubr.bf16.gmra.mrb[0].mxu0 %v483
        %v630 = vpop.f32.mrb[0].mxu0
        %v631 = vadd.f32 %v506, %v630
        %v632 = vpop.f32.mrb[0].mxu0
        %v633 = vpop.f32.mrb[0].mxu0
        %v634 = vadd.f32 %v506, %v633
        %v635 = vpop.f32.mrb[0].mxu0
        %636 = vmatprep.mubr.bf16.mxu0 0
        %637 = vmatmul.mubr.bf16.gmra.mrb[0].mxu0 %v484
        %v638 = vpop.f32.mrb[0].mxu0
        %v639 = vadd.f32 %v506, %v638
        %v640 = vpop.f32.mrb[0].mxu0
        %v641 = vpop.f32.mrb[0].mxu0
        %v642 = vadd.f32 %v506, %v641
        %v643 = vpop.f32.mrb[0].mxu0
        %644 = vdwg.mxu0
        %v645 = vmax.f32 %v591, 0.0
        %v646 = vmax.f32 %v594, 0.0
        %v647 = vmax.f32 %v599, 0.0
        %v648 = vmax.f32 %v602, 0.0
        %v649 = vmax.f32 %v607, 0.0
        %v650 = vmax.f32 %v610, 0.0
        %v651 = vmax.f32 %v615, 0.0
        %v652 = vmax.f32 %v618, 0.0
        %v653 = vmax.f32 %v623, 0.0
        %v654 = vmax.f32 %v626, 0.0
        %v655 = vmax.f32 %v631, 0.0
        %v656 = vmax.f32 %v634, 0.0
        %v657 = vmax.f32 %v639, 0.0
        %v658 = vmax.f32 %v642, 0.0
        %v659 = vpack.c.bf16 %v646, %v645
        %v660 = vpack.c.bf16 %v648, %v647
        %v661 = vpack.c.bf16 %v650, %v649
        %v662 = vpack.c.bf16 %v652, %v651
        %v663 = vpack.c.bf16 %v654, %v653
        %v664 = vpack.c.bf16 %v656, %v655
        %v665 = vpack.c.bf16 %v658, %v657
        %v666 = vld [vmem:[%s5] sm:$0xf]
        %v667 = vld [vmem:[%s5 + $0x4] sm:$0xf]
        %v668 = vld [vmem:[%s5 + $0x8] sm:$0xf]
        %v669 = vld [vmem:[%s5 + $0xc] sm:$0xf]
        %v670 = vld [vmem:[%s5 + $0x10] sm:$0xf]
        %v671 = vld [vmem:[%s5 + $0x14] sm:$0xf]
        %v672 = vld [vmem:[%s5 + $0x18] sm:$0xf]
        %v673 = vld [vmem:[%s5 + $0x1c] sm:$0xf]
        %v674 = vld [vmem:[%s5 + $0x20] sm:$0xf]
        %v675 = vld [vmem:[%s5 + $0x24] sm:$0xf]
        %v676 = vld [vmem:[%s5 + $0x28] sm:$0xf]
        %v677 = vld [vmem:[%s5 + $0x2c] sm:$0xf]
        %v678 = vld [vmem:[%s5 + $0x30] sm:$0xf]
        %v679 = vld [vmem:[%s5 + $0x34] sm:$0xf]
        %v680 = vld [vmem:[%s5 + $0x38] sm:$0xf]
        %v681 = vld [vmem:[%s5 + $0x3c] sm:$0xf]
        %v682 = vld [vmem:[%s6] sm:$0x1]
        %v684 = vlaneseq
        %v685 = vshrl.u32 %v684, 7
        %v686 = vsub.s32 0, %v685
        %v687 = vrot.slane %v682, %v686
        %v705 = vunpack.c.l.b16 %v666
        %v706 = vunpack.c.l.b16 %v667
        %v707 = vunpack.c.l.b16 %v668
        %v708 = vunpack.c.l.b16 %v669
        %v709 = vunpack.c.l.b16 %v670
        %v710 = vunpack.c.l.b16 %v671
        %v711 = vunpack.c.l.b16 %v672
        %v712 = vunpack.c.l.b16 %v673
        %v713 = vunpack.c.l.b16 %v674
        %v714 = vunpack.c.l.b16 %v675
        %v715 = vunpack.c.l.b16 %v676
        %v716 = vunpack.c.l.b16 %v677
        %v717 = vunpack.c.l.b16 %v678
        %v718 = vunpack.c.l.b16 %v679
        %v719 = vunpack.c.l.b16 %v680
        %v720 = vunpack.c.l.b16 %v681
        %v721 = vpack.c.b16 %v706, %v705
        %v722 = vpack.c.b16 %v708, %v707
        %v723 = vpack.c.b16 %v710, %v709
        %v724 = vpack.c.b16 %v712, %v711
        %v725 = vpack.c.b16 %v714, %v713
        %v726 = vpack.c.b16 %v716, %v715
        %v727 = vpack.c.b16 %v718, %v717
        %v728 = vpack.c.b16 %v720, %v719
        %737 = vmatprep.subr.bf16.mxu0 0
        %738 = vmatpush1.bf16.msra.mxu0 %v721
        %739 = vmatprep.subr.bf16.mxu0 0
        %740 = vmatpush1.bf16.msra.mxu0 %v722
        %741 = vmatprep.subr.bf16.mxu0 0
        %742 = vmatpush1.bf16.msra.mxu0 %v723
        %743 = vmatprep.subr.bf16.mxu0 0
        %744 = vmatpush1.bf16.msra.mxu0 %v724
        %745 = vmatprep.subr.bf16.mxu0 0
        %746 = vmatpush1.bf16.msra.mxu0 %v725
        %747 = vmatprep.subr.bf16.mxu0 0
        %748 = vmatpush1.bf16.msra.mxu0 %v726
        %749 = vmatprep.subr.bf16.mxu0 0
        %750 = vmatpush1.bf16.msra.mxu0 %v727
        %751 = vmatprep.subr.bf16.mxu0 0
        %752 = vmatpush1.bf16.msra.mxu0 %v728
        %753 = vmatprep.subr.bf16.mxu0 0
        %754 = vmatpush1.bf16.msra.mxu0 0
        %755 = vmatprep.subr.bf16.mxu0 0
        %756 = vmatpush1.bf16.msra.mxu0 0
        %757 = vmatprep.subr.bf16.mxu0 0
        %758 = vmatpush1.bf16.msra.mxu0 0
        %759 = vmatprep.subr.bf16.mxu0 0
        %760 = vmatpush1.bf16.msra.mxu0 0
        %761 = vmatprep.subr.bf16.mxu0 0
        %762 = vmatpush1.bf16.msra.mxu0 0
        %763 = vmatprep.subr.bf16.mxu0 0
        %764 = vmatpush1.bf16.msra.mxu0 0
        %765 = vmatprep.subr.bf16.mxu0 0
        %766 = vmatpush1.bf16.msra.mxu0 0
        %767 = vmatprep.subr.bf16.mxu0 0
        %768 = vmatpush1.bf16.msra.mxu0 0
        %769 = vmatprep.mubr.bf16.mxu0 0
        %770 = vmatmul.mubr.bf16.gmra.mrb[0].mxu0 %v659
        %v771 = vpop.f32.mrb[0].mxu0
        %v772 = vadd.f32 %v687, %v771
        %v773 = vpop.f32.mrb[0].mxu0
        %v774 = vpop.f32.mrb[0].mxu0
        %v775 = vadd.f32 %v687, %v774
        %v776 = vpop.f32.mrb[0].mxu0
        %777 = vmatprep.mubr.bf16.mxu0 0
        %778 = vmatmul.mubr.bf16.gmra.mrb[0].mxu0 %v660
        %v779 = vpop.f32.mrb[0].mxu0
        %v780 = vadd.f32 %v687, %v779
        %v781 = vpop.f32.mrb[0].mxu0
        %v782 = vpop.f32.mrb[0].mxu0
        %v783 = vadd.f32 %v687, %v782
        %v784 = vpop.f32.mrb[0].mxu0
        %785 = vmatprep.mubr.bf16.mxu0 0
        %786 = vmatmul.mubr.bf16.gmra.mrb[0].mxu0 %v661
        %v787 = vpop.f32.mrb[0].mxu0
        %v788 = vadd.f32 %v687, %v787
        %v789 = vpop.f32.mrb[0].mxu0
        %v790 = vpop.f32.mrb[0].mxu0
        %v791 = vadd.f32 %v687, %v790
        %v792 = vpop.f32.mrb[0].mxu0
        %793 = vmatprep.mubr.bf16.mxu0 0
        %794 = vmatmul.mubr.bf16.gmra.mrb[0].mxu0 %v662
        %v795 = vpop.f32.mrb[0].mxu0
        %v796 = vadd.f32 %v687, %v795
        %v797 = vpop.f32.mrb[0].mxu0
        %v798 = vpop.f32.mrb[0].mxu0
        %v799 = vadd.f32 %v687, %v798
        %v800 = vpop.f32.mrb[0].mxu0
        %801 = vmatprep.mubr.bf16.mxu0 0
        %802 = vmatmul.mubr.bf16.gmra.mrb[0].mxu0 %v663
        %v803 = vpop.f32.mrb[0].mxu0
        %v804 = vadd.f32 %v687, %v803
        %v805 = vpop.f32.mrb[0].mxu0
        %v806 = vpop.f32.mrb[0].mxu0
        %v807 = vadd.f32 %v687, %v806
        %v808 = vpop.f32.mrb[0].mxu0
        %809 = vmatprep.mubr.bf16.mxu0 0
        %810 = vmatmul.mubr.bf16.gmra.mrb[0].mxu0 %v664
        %v811 = vpop.f32.mrb[0].mxu0
        %v812 = vadd.f32 %v687, %v811
        %v813 = vpop.f32.mrb[0].mxu0
        %v814 = vpop.f32.mrb[0].mxu0
        %v815 = vadd.f32 %v687, %v814
        %v816 = vpop.f32.mrb[0].mxu0
        %817 = vmatprep.mubr.bf16.mxu0 0
        %818 = vmatmul.mubr.bf16.gmra.mrb[0].mxu0 %v665
        %v819 = vpop.f32.mrb[0].mxu0
        %v820 = vadd.f32 %v687, %v819
        %v821 = vpop.f32.mrb[0].mxu0
        %v822 = vpop.f32.mrb[0].mxu0
        %v823 = vadd.f32 %v687, %v822
        %v824 = vpop.f32.mrb[0].mxu0
        %825 = vdwg.mxu0
        %v826 = vpack.c.bf16 %v775, %v772
        %v827 = vpack.c.bf16 %v783, %v780
        %v828 = vpack.c.bf16 %v791, %v788
        %v829 = vpack.c.bf16 %v799, %v796
        %v830 = vpack.c.bf16 %v807, %v804
        %v831 = vpack.c.bf16 %v815, %v812
        %v832 = vpack.c.bf16 %v823, %v820
        %v840 = vunpack.c.l.b16 %v826
        %v841 = vunpack.c.h.b16 %v826
        %v842 = vunpack.c.l.b16 %v827
        %v843 = vunpack.c.h.b16 %v827
        %v844 = vunpack.c.l.b16 %v828
        %v845 = vunpack.c.h.b16 %v828
        %v846 = vunpack.c.l.b16 %v829
        %v847 = vunpack.c.h.b16 %v829
        %v848 = vunpack.c.l.b16 %v830
        %v849 = vunpack.c.h.b16 %v830
        %v850 = vunpack.c.l.b16 %v831
        %v851 = vunpack.c.h.b16 %v831
        %v852 = vunpack.c.l.b16 %v832
        %v853 = vunpack.c.h.b16 %v832
        %v854 = vpack.c.b16 %v840, %v840
        %v855 = vpack.c.b16 %v841, %v841
        %v856 = vpack.c.b16 %v842, %v842
        %v857 = vpack.c.b16 %v843, %v843
        %v858 = vpack.c.b16 %v844, %v844
        %v859 = vpack.c.b16 %v845, %v845
        %v860 = vpack.c.b16 %v846, %v846
        %v861 = vpack.c.b16 %v847, %v847
        %v862 = vpack.c.b16 %v848, %v848
        %v863 = vpack.c.b16 %v849, %v849
        %v864 = vpack.c.b16 %v850, %v850
        %v865 = vpack.c.b16 %v851, %v851
        %v866 = vpack.c.b16 %v852, %v852
        %v867 = vpack.c.b16 %v853, %v853
        %882 = vst [vmem:[%s272] sm:$0xf] %v854
        %883 = vst [vmem:[%s272 + $0x4] sm:$0xf] %v855
        %884 = vst [vmem:[%s272 + $0x8] sm:$0xf] %v856
        %885 = vst [vmem:[%s272 + $0xc] sm:$0xf] %v857
        %886 = vst [vmem:[%s272 + $0x10] sm:$0xf] %v858
        %887 = vst [vmem:[%s272 + $0x14] sm:$0xf] %v859
        %888 = vst [vmem:[%s272 + $0x18] sm:$0xf] %v860
        %889 = vst [vmem:[%s272 + $0x1c] sm:$0xf] %v861
        %890 = vst [vmem:[%s272 + $0x20] sm:$0xf] %v862
        %891 = vst [vmem:[%s272 + $0x24] sm:$0xf] %v863
        %892 = vst [vmem:[%s272 + $0x28] sm:$0xf] %v864
        %893 = vst [vmem:[%s272 + $0x2c] sm:$0xf] %v865
        %894 = vst [vmem:[%s272 + $0x30] sm:$0xf] %v866
        %895 = vst [vmem:[%s272 + $0x34] sm:$0xf] %v867
        %s896 = sand.u32 %s181, 1
        %s897 = scalar_lea.sflag [#allocation3], %s896
        %s898 = sand.u32 %s181, 1
        %s899 = smul.addr %s898, 56
        %s900 = scalar_lea.vmem [#allocation2], %s899
        // Predicated region
        $region49: #{tpu_custom_call.1} parent=47 // pred_check
          %p901 = pneg %p191
        $region50: #{tpu_custom_call.1} parent=47 // pred_check_branch
          %903 = sbr.rel (%p901) target = $region52
        $region51: #{tpu_custom_call.1} parent=47 // pred_region
          %s904 = smul.u32 14, %s21
          %s906 = ssub.s32 896, 896
          %907 = vsyncadd %s897, %s906
          %s908 = smul.addr %s904, 64
          %s909 = scalar_lea.hbm %s7, %s908
          %s910 = sshll.u32 %s900, 4
          %s911 = int_to_ptr.vmem [resolvable:$true] %s910
          %916 = dma.vmem_to_hbm [thread:$0]  %s911, 896, %s909, %s897, 64, 64, 4
        $region52: #{tpu_custom_call.1} parent=47 // pred_fallthru
          _
      $region48: #{tpu_custom_call.1} parent=5 // pred_fallthru
        _
      %p917 = scmp.le.s32.totalorder 2, %s16
      // Predicated region
      $region53: #{tpu_custom_call.1} parent=5 // pred_check
        %p918 = pneg %p917
      $region54: #{tpu_custom_call.1} parent=5 // pred_check_branch
        %920 = sbr.rel (%p918) target = $region56
      $region55: #{tpu_custom_call.1} parent=5 // pred_region
        %s921 = ssub.s32 %s16, 2
        // Predicated region
        $region57: #{tpu_custom_call.1} parent=55 // pred_check
          %p922 = pneg %p197
        $region58: #{tpu_custom_call.1} parent=55 // pred_check_branch
          %924 = sbr.rel (%p922) target = $region60
        $region59: #{tpu_custom_call.1} parent=55 // pred_region
          %s925 = sand.u32 %s182, 1
          %s926 = scalar_lea.sflag [#allocation3], %s925
          %s927 = sand.u32 %s182, 1
          %s928 = smul.addr %s927, 56
          %s929 = scalar_lea.vmem [#allocation2], %s928
          %930 = dma.done %s926, 896
        $region60: #{tpu_custom_call.1} parent=55 // pred_fallthru
          _
      $region56: #{tpu_custom_call.1} parent=5 // pred_fallthru
        _
    $region6: #{tpu_custom_call.1} parent=1 // loop_footer
      %s20 = sadd.s32 1, %s16
    $region7: #{tpu_custom_call.1} parent=1 // loop_footer_branch
      %15 = sbr.rel target = $region3
    $region8: #{tpu_custom_call.1} parent=1 // loop_exit
      _
    %931 = vsyncpa [#allocation3], 1
    %s932 = scalar_lea.sflag [#allocation3], 1
    %933 = vsyncpa %s932, 1

</llo_original>
